<compile_context>
chip_gen: v7x
topology: tpu7x:2x2x1
jax: 0.10.0
libtpu: 0.0.40
codegen_flags: <defaults>
</compile_context>

<pallas_src>
import numpy as np
import jax
import jax.numpy as jnp
from jax.experimental import pallas as pl
from jax.experimental.pallas import tpu as pltpu

# ---- module hyper-parameters (synthetic, consistent with __init__) ----------
MOVE_FEATS = 4
ENEMY_FEATS = 8
ENEMIES_NUM = 5                     # module hard-codes 5 enemy branches
AGENT_FEATS = 8
AGENTS_NUM = 3
OTHER_FEATS = 3
ASN_HIDDEN = 40                     # divisible by ENEMIES_NUM -> per-enemy 8
H5 = ASN_HIDDEN // ENEMIES_NUM
INPUT_SHAPE = (MOVE_FEATS
               + ENEMY_FEATS * ENEMIES_NUM
               + AGENT_FEATS * (AGENTS_NUM - 1)
               + 1
               + OTHER_FEATS)       # = 64
ENEMY_START = MOVE_FEATS            # enemies_feat_start
N_WO_ACTIONS = 6
Q_DIM = N_WO_ACTIONS + ENEMIES_NUM  # 11
BATCH = 8
RNN_HIDDEN = 32

# ---- packed sizes ------------------------------------------------------------
S1 = ASN_HIDDEN + ENEMIES_NUM * H5          # 80  : [h1 | eh1_all]
S2 = ASN_HIDDEN + ENEMIES_NUM * ASN_HIDDEN  # 240 : [h2 | eh2_all]
OUT_PAD = 128                               # lane-dense output width
W1_ROWS = INPUT_SHAPE                       # 64
W2_ROW0 = W1_ROWS                           # 64
W3_ROW0 = W1_ROWS + S1                      # 144
W_ROWS = W1_ROWS + S1 + S2                  # 384 (multiple of 8)


def asn_kernel(x_ref, w_ref, b_ref, out_ref):
    x = x_ref[...]                                   # (B, 64)

    # static slices of the packed parameter blobs (aligned sublane offsets)
    w1p = w_ref[0:W1_ROWS, 0:S1]                     # (64, 80)
    w2p = w_ref[W2_ROW0:W2_ROW0 + S1, 0:S2]          # (80, 240)
    w3p = w_ref[W3_ROW0:W3_ROW0 + S2, 0:OUT_PAD]     # (240, 128)
    b1p = b_ref[0:1, 0:S1]                           # (1, 80)
    b2p = b_ref[1:2, 0:S2]                           # (1, 240)
    b3p = b_ref[2:3, 0:OUT_PAD]                      # (1, 128)

    # stage 1: env fc1 + all 5 enemy fc1 in one matmul (both ReLU'd)
    z1 = jnp.maximum(
        jnp.dot(x, w1p, preferred_element_type=jnp.float32) + b1p, 0.0)

    # stage 2: env fc2 + all 5 enemy fc2 in one matmul (no ReLU)
    z2 = jnp.dot(z1, w2p, preferred_element_type=jnp.float32) + b2p

    h2 = z2[:, 0:ASN_HIDDEN]                         # (B, 40)  env_hidden_2
    eh2 = z2[:, ASN_HIDDEN:S2]                       # (B, 200) 5 enemy hiddens
    h2_rep = jnp.concatenate([h2] * ENEMIES_NUM, axis=-1)   # (B, 200)
    u = jnp.concatenate([h2, h2_rep * eh2], axis=-1)        # (B, 240)

    # stage 3: action head + the 5 attention-score sums, one matmul,
    # producing a lane-dense (B, 128) result (cols 11..127 are exactly 0).
    out_ref[...] = (
        jnp.dot(u, w3p, preferred_element_type=jnp.float32) + b3p)


def asn_forward(inputs, hidden_state, packed_params):
    """Returns (q, hidden_state) matching the PyTorch module."""
    w_blob, b_blob = packed_params
    B = inputs.shape[0]
    vmem = pl.BlockSpec(memory_space=pltpu.MemorySpace.VMEM)
    q_pad = pl.pallas_call(
        asn_kernel,
        out_shape=jax.ShapeDtypeStruct((B, OUT_PAD), jnp.float32),
        in_specs=[vmem, vmem, vmem],
        out_specs=vmem,
    )(inputs, w_blob, b_blob)
    return q_pad[:, :Q_DIM], hidden_state


# ---- host-side parameter construction & packing ------------------------------
def make_params(key):
    ks = jax.random.split(key, 10)
    s = 0.1
    w1 = s * jax.random.normal(ks[0], (INPUT_SHAPE, ASN_HIDDEN), jnp.float32)
    b1 = s * jax.random.normal(ks[1], (1, ASN_HIDDEN), jnp.float32)
    w2 = s * jax.random.normal(ks[2], (ASN_HIDDEN, ASN_HIDDEN), jnp.float32)
    b2 = s * jax.random.normal(ks[3], (1, ASN_HIDDEN), jnp.float32)
    wq = s * jax.random.normal(ks[4], (ASN_HIDDEN, N_WO_ACTIONS), jnp.float32)
    bq = s * jax.random.normal(ks[5], (1, N_WO_ACTIONS), jnp.float32)
    we1 = s * jax.random.normal(ks[6], (ENEMIES_NUM, ENEMY_FEATS, H5), jnp.float32)
    be1 = s * jax.random.normal(ks[7], (ENEMIES_NUM, H5), jnp.float32)
    we2 = s * jax.random.normal(ks[8], (ENEMIES_NUM, H5, ASN_HIDDEN), jnp.float32)
    be2 = s * jax.random.normal(ks[9], (ENEMIES_NUM, ASN_HIDDEN), jnp.float32)
    return (w1, b1, w2, b2, wq, bq, we1, be1, we2, be2)


def pack_params(params):
    """Block-diagonal packing -> one weight blob + one bias blob."""
    (w1, b1, w2, b2, wq, bq, we1, be1, we2, be2) = map(np.asarray, params)

    # stage 1: (64, 80) -> [h1 | eh1_all]
    w1p = np.zeros((INPUT_SHAPE, S1), np.float32)
    w1p[:, :ASN_HIDDEN] = w1
    for i in range(ENEMIES_NUM):
        r0 = ENEMY_START + i * ENEMY_FEATS
        c0 = ASN_HIDDEN + i * H5
        w1p[r0:r0 + ENEMY_FEATS, c0:c0 + H5] = we1[i]
    b1p = np.zeros((S1,), np.float32)
    b1p[:ASN_HIDDEN] = b1.reshape(-1)
    b1p[ASN_HIDDEN:] = be1.reshape(-1)

    # stage 2: (80, 240) -> [h2 | eh2_all]
    w2p = np.zeros((S1, S2), np.float32)
    w2p[:ASN_HIDDEN, :ASN_HIDDEN] = w2
    for i in range(ENEMIES_NUM):
        r0 = ASN_HIDDEN + i * H5
        c0 = ASN_HIDDEN + i * ASN_HIDDEN
        w2p[r0:r0 + H5, c0:c0 + ASN_HIDDEN] = we2[i]
    b2p = np.zeros((S2,), np.float32)
    b2p[:ASN_HIDDEN] = b2.reshape(-1)
    b2p[ASN_HIDDEN:] = be2.reshape(-1)

    # stage 3: (240, 128) -> [wo_q | attack scores | zeros]
    w3p = np.zeros((S2, OUT_PAD), np.float32)
    w3p[:ASN_HIDDEN, :N_WO_ACTIONS] = wq
    for i in range(ENEMIES_NUM):
        r0 = ASN_HIDDEN + i * ASN_HIDDEN
        w3p[r0:r0 + ASN_HIDDEN, N_WO_ACTIONS + i] = 1.0   # segment sum
    b3p = np.zeros((OUT_PAD,), np.float32)
    b3p[:N_WO_ACTIONS] = bq.reshape(-1)

    w_blob = np.zeros((W_ROWS, S2), np.float32)
    w_blob[0:W1_ROWS, 0:S1] = w1p
    w_blob[W2_ROW0:W2_ROW0 + S1, 0:S2] = w2p
    w_blob[W3_ROW0:W3_ROW0 + S2, 0:OUT_PAD] = w3p

    b_blob = np.zeros((3, S2), np.float32)
    b_blob[0, 0:S1] = b1p
    b_blob[1, 0:S2] = b2p
    b_blob[2, 0:OUT_PAD] = b3p

    return jnp.asarray(w_blob), jnp.asarray(b_blob)


# ---- pure-JAX reference of the PyTorch forward (for verification) ------------
def asn_reference(inputs, params):
    (w1, b1, w2, b2, wq, bq, we1, be1, we2, be2) = params
    h1 = jax.nn.relu(inputs @ w1 + b1)
    h2 = h1 @ w2 + b2
    wo_q = h2 @ wq + bq
    attack = []
    for i in range(ENEMIES_NUM):
        lo = ENEMY_START + i * ENEMY_FEATS
        ef = inputs[:, lo:lo + ENEMY_FEATS]
        eh1 = jax.nn.relu(ef @ we1[i] + be1[i])
        eh2 = eh1 @ we2[i] + be2[i]
        attack.append(jnp.sum(h2 * eh2, axis=-1, keepdims=True))
    return jnp.concatenate([wo_q] + attack, axis=-1)


if __name__ == "__main__":
    key = jax.random.PRNGKey(0)
    k_in, k_p = jax.random.split(key)
    inputs = jax.random.normal(k_in, (BATCH, INPUT_SHAPE), jnp.float32)
    hidden_state = jnp.zeros((BATCH, RNN_HIDDEN), jnp.float32)
    params = make_params(k_p)
    packed = pack_params(params)

    q, h_out = asn_forward(inputs, hidden_state, packed)
    q = jax.block_until_ready(q)

    q_ref = asn_reference(inputs, params)
    assert q.shape == (BATCH, Q_DIM)
    assert h_out.shape == hidden_state.shape
    assert jnp.allclose(q, q_ref, atol=1e-4, rtol=1e-3), "mismatch vs reference"
    print("KERNEL_OK")
</pallas_src>

<mosaic_0001>
module attributes {stable_mosaic.version = 11 : i64} {
  func.func @asn_kernel(%arg0: memref<8x64xf32, #tpu.memory_space<vmem>>, %arg1: memref<384x240xf32, #tpu.memory_space<vmem>>, %arg2: memref<3x240xf32, #tpu.memory_space<vmem>>, %arg3: memref<8x128xf32, #tpu.memory_space<vmem>>) attributes {dimension_semantics = [], scalar_prefetch = 0 : i64, scratch_operands = 0 : i64, tpu.core_type = #tpu.core_type<tc>} {
    %c0 = arith.constant 0 : index
    %c0_0 = arith.constant 0 : index
    %0 = vector.load %arg0[%c0, %c0_0] : memref<8x64xf32, #tpu.memory_space<vmem>>, vector<8x64xf32>
    %c0_1 = arith.constant 0 : index
    %c0_2 = arith.constant 0 : index
    %1 = vector.load %arg1[%c0_1, %c0_2] : memref<384x240xf32, #tpu.memory_space<vmem>>, vector<64x80xf32>
    %c64 = arith.constant 64 : index
    %c0_3 = arith.constant 0 : index
    %2 = vector.load %arg1[%c64, %c0_3] : memref<384x240xf32, #tpu.memory_space<vmem>>, vector<80x240xf32>
    %c144 = arith.constant 144 : index
    %c0_4 = arith.constant 0 : index
    %3 = vector.load %arg1[%c144, %c0_4] : memref<384x240xf32, #tpu.memory_space<vmem>>, vector<240x128xf32>
    %c0_5 = arith.constant 0 : index
    %c0_6 = arith.constant 0 : index
    %4 = vector.load %arg2[%c0_5, %c0_6] : memref<3x240xf32, #tpu.memory_space<vmem>>, vector<1x80xf32>
    %c1 = arith.constant 1 : index
    %c0_7 = arith.constant 0 : index
    %5 = vector.load %arg2[%c1, %c0_7] : memref<3x240xf32, #tpu.memory_space<vmem>>, vector<1x240xf32>
    %c2 = arith.constant 2 : index
    %c0_8 = arith.constant 0 : index
    %6 = vector.load %arg2[%c2, %c0_8] : memref<3x240xf32, #tpu.memory_space<vmem>>, vector<1x128xf32>
    %cst = arith.constant dense<0.000000e+00> : vector<8x80xf32>
    %7 = tpu.matmul %0, %1, %cst {dimension_numbers = #tpu.dot_dimension_numbers<[1], [0], [0], [1], [0, 0, 1, 1], [], []>} : vector<8x64xf32>, vector<64x80xf32>, vector<8x80xf32> -> vector<8x80xf32>
    %8 = vector.broadcast %4 : vector<1x80xf32> to vector<8x80xf32>
    %9 = arith.addf %7, %8 : vector<8x80xf32>
    %cst_9 = arith.constant 0.000000e+00 : f32
    %10 = vector.broadcast %cst_9 : f32 to vector<8x80xf32>
    %11 = arith.maximumf %9, %10 : vector<8x80xf32>
    %cst_10 = arith.constant dense<0.000000e+00> : vector<8x240xf32>
    %12 = tpu.matmul %11, %2, %cst_10 {dimension_numbers = #tpu.dot_dimension_numbers<[1], [0], [0], [1], [0, 0, 1, 1], [], []>} : vector<8x80xf32>, vector<80x240xf32>, vector<8x240xf32> -> vector<8x240xf32>
    %13 = vector.broadcast %5 : vector<1x240xf32> to vector<8x240xf32>
    %14 = arith.addf %12, %13 : vector<8x240xf32>
    %15 = vector.extract_strided_slice %14 {offsets = [0, 0], sizes = [8, 40], strides = [1, 1]} : vector<8x240xf32> to vector<8x40xf32>
    %16 = vector.extract_strided_slice %14 {offsets = [0, 40], sizes = [8, 200], strides = [1, 1]} : vector<8x240xf32> to vector<8x200xf32>
    %17 = tpu.concatenate %15, %15, %15, %15, %15 in 1 : vector<8x40xf32>, vector<8x40xf32>, vector<8x40xf32>, vector<8x40xf32>, vector<8x40xf32> -> vector<8x200xf32>
    %18 = arith.mulf %17, %16 : vector<8x200xf32>
    %19 = tpu.concatenate %15, %18 in 1 : vector<8x40xf32>, vector<8x200xf32> -> vector<8x240xf32>
    %cst_11 = arith.constant dense<0.000000e+00> : vector<8x128xf32>
    %20 = tpu.matmul %19, %3, %cst_11 {dimension_numbers = #tpu.dot_dimension_numbers<[1], [0], [0], [1], [0, 0, 1, 1], [], []>} : vector<8x240xf32>, vector<240x128xf32>, vector<8x128xf32> -> vector<8x128xf32>
    %21 = vector.broadcast %6 : vector<1x128xf32> to vector<8x128xf32>
    %22 = arith.addf %20, %21 : vector<8x128xf32>
    %c0_12 = arith.constant 0 : index
    %c0_13 = arith.constant 0 : index
    %23 = vector.load %arg3[%c0_12, %c0_13] : memref<8x128xf32, #tpu.memory_space<vmem>>, vector<8x128xf32>
    tpu.vector_store %arg3[%c0_12, %c0_13], %22 {strides = array<i32>} : memref<8x128xf32, #tpu.memory_space<vmem>>, vector<8x128xf32>,
    return
  }
}

</mosaic_0001>

<llo_original>
// kernel: tpu_custom_call.1
$region0: #{tpu_custom_call.1}
  #allocation0 [shape = 'u32[]', space=smem, size = 0x4, offset = 0x4, fixed_abs, tag = 'smem constant byte address 0x4 - core index']
  #allocation1 [shape = 'u32[144,128]{1,0:T(1,128)}', space=vmem, size = 0x12000, scoped, tag = 'internal scratch']
  %s0 = inlined_call_operand.vmem [shape: f32[8,64], index: 0, kind: input, shape index: {}]
  %s1 = inlined_call_operand.vmem [shape: f32[384,240], index: 1, kind: input, shape index: {}]
  %s2 = inlined_call_operand.vmem [shape: f32[3,240], index: 2, kind: input, shape index: {}]
  %s3 = inlined_call_operand.hbm [shape: f32[8,128], index: 3, kind: output, shape index: {}]
  %s4 = sld [smem:[#allocation0]]
  $region22: #{tpu_custom_call.1} parent=0
    _
  %s6 = ssub.s32 1, %s4
  %s7 = scalar_select 0, %s6, %s4
  $region1: #{tpu_custom_call.1} parent=0
    #allocation2 [shape = 'u8[4096]{0}', space=vmem, size = 0x1000, scoped, tag = 'output window, operand 0, single buffered']
    #allocation3 [shape = 's32[1]{0}', space=sflag, size = 0x4, scoped, tag = 'scoped memory for tpu_custom_call.1']
    %8 = vsyncpa [#allocation3], 0
    // Predicated region
    $region2: #{tpu_custom_call.1} parent=1 // pred_check
      _
    $region3: #{tpu_custom_call.1} parent=1 // pred_check_branch
      %10 = sbr.rel (0) target = $region5
    $region4: #{tpu_custom_call.1} parent=1 // pred_region
      _
    $region5: #{tpu_custom_call.1} parent=1 // pred_fallthru
      _
    // Predicated region
    $region6: #{tpu_custom_call.1} parent=1 // pred_check
      _
    $region7: #{tpu_custom_call.1} parent=1 // pred_check_branch
      %12 = sbr.rel (0) target = $region9
    $region8: #{tpu_custom_call.1} parent=1 // pred_region
      _
    $region9: #{tpu_custom_call.1} parent=1 // pred_fallthru
      _
    // Predicated region
    $region10: #{tpu_custom_call.1} parent=1 // pred_check
      _
    $region11: #{tpu_custom_call.1} parent=1 // pred_check_branch
      %14 = sbr.rel (0) target = $region13
    $region12: #{tpu_custom_call.1} parent=1 // pred_region
      _
    $region13: #{tpu_custom_call.1} parent=1 // pred_fallthru
      _
    %v15 = vld [vmem:[%s0] sm:$0xff]
    %v16 = vld [vmem:[%s1] sm:$0xff]
    %v17 = vld [vmem:[%s1 + $0x10] sm:$0xff]
    %v18 = vld [vmem:[%s1 + $0x20] sm:$0xff]
    %v19 = vld [vmem:[%s1 + $0x30] sm:$0xff]
    %v20 = vld [vmem:[%s1 + $0x40] sm:$0xff]
    %v21 = vld [vmem:[%s1 + $0x50] sm:$0xff]
    %v22 = vld [vmem:[%s1 + $0x60] sm:$0xff]
    %v23 = vld [vmem:[%s1 + $0x70] sm:$0xff]
    %v24 = vld [vmem:[%s1 + $0x80] sm:$0xff]
    %v25 = vld [vmem:[%s1 + $0x88] sm:$0xff]
    %v26 = vld [vmem:[%s1 + $0x90] sm:$0xff]
    %v27 = vld [vmem:[%s1 + $0x98] sm:$0xff]
    %v28 = vld [vmem:[%s1 + $0xa0] sm:$0xff]
    %v29 = vld [vmem:[%s1 + $0xa8] sm:$0xff]
    %v30 = vld [vmem:[%s1 + $0xb0] sm:$0xff]
    %v31 = vld [vmem:[%s1 + $0xb8] sm:$0xff]
    %v32 = vld [vmem:[%s1 + $0xc0] sm:$0xff]
    %v33 = vld [vmem:[%s1 + $0xc8] sm:$0xff]
    %v34 = vld [vmem:[%s1 + $0xd0] sm:$0xff]
    %v35 = vld [vmem:[%s1 + $0xd8] sm:$0xff]
    %v36 = vld [vmem:[%s1 + $0xe0] sm:$0xff]
    %v37 = vld [vmem:[%s1 + $0xe8] sm:$0xff]
    %v38 = vld [vmem:[%s1 + $0xf0] sm:$0xff]
    %v39 = vld [vmem:[%s1 + $0xf8] sm:$0xff]
    %v40 = vld [vmem:[%s1 + $0x100] sm:$0xff]
    %v41 = vld [vmem:[%s1 + $0x108] sm:$0xff]
    %v42 = vld [vmem:[%s1 + $0x110] sm:$0xff]
    %v43 = vld [vmem:[%s1 + $0x118] sm:$0xff]
    %v44 = vld [vmem:[%s1 + $0x120] sm:$0xff]
    %v45 = vld [vmem:[%s1 + $0x130] sm:$0xff]
    %v46 = vld [vmem:[%s1 + $0x140] sm:$0xff]
    %v47 = vld [vmem:[%s1 + $0x150] sm:$0xff]
    %v48 = vld [vmem:[%s1 + $0x160] sm:$0xff]
    %v49 = vld [vmem:[%s1 + $0x170] sm:$0xff]
    %v50 = vld [vmem:[%s1 + $0x180] sm:$0xff]
    %v51 = vld [vmem:[%s1 + $0x190] sm:$0xff]
    %v52 = vld [vmem:[%s1 + $0x1a0] sm:$0xff]
    %v53 = vld [vmem:[%s1 + $0x1b0] sm:$0xff]
    %v54 = vld [vmem:[%s1 + $0x1c0] sm:$0xff]
    %v55 = vld [vmem:[%s1 + $0x1d0] sm:$0xff]
    %v56 = vld [vmem:[%s1 + $0x1e0] sm:$0xff]
    %v57 = vld [vmem:[%s1 + $0x1f0] sm:$0xff]
    %v58 = vld [vmem:[%s1 + $0x200] sm:$0xff]
    %v59 = vld [vmem:[%s1 + $0x210] sm:$0xff]
    %v60 = vld [vmem:[%s1 + $0x220] sm:$0xff]
    %v61 = vld [vmem:[%s1 + $0x230] sm:$0xff]
    %v62 = vld [vmem:[%s1 + $0x240] sm:$0xff]
    %v63 = vld [vmem:[%s1 + $0x250] sm:$0xff]
    %v64 = vld [vmem:[%s1 + $0x260] sm:$0xff]
    %v65 = vld [vmem:[%s1 + $0x270] sm:$0xff]
    %v66 = vld [vmem:[%s1 + $0x280] sm:$0xff]
    %v67 = vld [vmem:[%s1 + $0x290] sm:$0xff]
    %v68 = vld [vmem:[%s1 + $0x2a0] sm:$0xff]
    %v69 = vld [vmem:[%s1 + $0x2b0] sm:$0xff]
    %v70 = vld [vmem:[%s1 + $0x2c0] sm:$0xff]
    %v71 = vld [vmem:[%s1 + $0x2d0] sm:$0xff]
    %v72 = vld [vmem:[%s1 + $0x2e0] sm:$0xff]
    %v73 = vld [vmem:[%s1 + $0x2f0] sm:$0xff]
    %v74 = vld [vmem:[%s2] sm:$0x1]
    %s75 = scalar_lea.vmem %s2, 1
    %v76 = vld [vmem:[%s75] ss:$4 sm:$0x3]
    %v77 = vld [vmem:[%s2 + $0x2] sm:$0x1]
    %v78 = vlaneseq
    %v79 = vshrl.u32 %v78, 7
    %v80 = vsub.s32 0, %v79
    %v81 = vrot.slane %v74, %v80
    %vm82 = vcmask 523264
    %v84 = vsel %vm82, %v15, 0
    %86 = vmatprep.subr.mxu0 0.0
    %87 = vmatpush1.msra.mxu0 %v16
    %88 = vmatprep.subr.mxu0 0.0
    %89 = vmatpush1.msra.mxu0 %v17
    %90 = vmatprep.subr.mxu0 0.0
    %91 = vmatpush1.msra.mxu0 %v18
    %92 = vmatprep.subr.mxu0 0.0
    %93 = vmatpush1.msra.mxu0 %v19
    %94 = vmatprep.subr.mxu0 0.0
    %95 = vmatpush1.msra.mxu0 %v20
    %96 = vmatprep.subr.mxu0 0.0
    %97 = vmatpush1.msra.mxu0 %v21
    %98 = vmatprep.subr.mxu0 0.0
    %99 = vmatpush1.msra.mxu0 %v22
    %100 = vmatprep.subr.mxu0 0.0
    %101 = vmatpush1.msra.mxu0 %v23
    %102 = vmatprep.subr.mxu0 0.0
    %103 = vmatpush1.msra.mxu0 0.0
    %104 = vmatprep.subr.mxu0 0.0
    %105 = vmatpush1.msra.mxu0 0.0
    %106 = vmatprep.subr.mxu0 0.0
    %107 = vmatpush1.msra.mxu0 0.0
    %108 = vmatprep.subr.mxu0 0.0
    %109 = vmatpush1.msra.mxu0 0.0
    %110 = vmatprep.subr.mxu0 0.0
    %111 = vmatpush1.msra.mxu0 0.0
    %112 = vmatprep.subr.mxu0 0.0
    %113 = vmatpush1.msra.mxu0 0.0
    %114 = vmatprep.subr.mxu0 0.0
    %115 = vmatpush1.msra.mxu0 0.0
    %116 = vmatprep.subr.mxu0 0.0
    %117 = vmatpush1.msra.mxu0 0.0
    %118 = vmatprep.subr.mxu0 0.0
    %119 = vmatpush1.msra.mxu0 0.0
    %120 = vmatprep.subr.mxu0 0.0
    %121 = vmatpush1.msra.mxu0 0.0
    %122 = vmatprep.subr.mxu0 0.0
    %123 = vmatpush1.msra.mxu0 0.0
    %124 = vmatprep.subr.mxu0 0.0
    %125 = vmatpush1.msra.mxu0 0.0
    %126 = vmatprep.subr.mxu0 0.0
    %127 = vmatpush1.msra.mxu0 0.0
    %128 = vmatprep.subr.mxu0 0.0
    %129 = vmatpush1.msra.mxu0 0.0
    %130 = vmatprep.subr.mxu0 0.0
    %131 = vmatpush1.msra.mxu0 0.0
    %132 = vmatprep.subr.mxu0 0.0
    %133 = vmatpush1.msra.mxu0 0.0
    %134 = vmatprep.subr.mxu0 0.0
    %135 = vmatpush1.msra.mxu0 0.0
    %136 = vmatprep.subr.mxu0 0.0
    %137 = vmatpush1.msra.mxu0 0.0
    %138 = vmatprep.subr.mxu0 0.0
    %139 = vmatpush1.msra.mxu0 0.0
    %140 = vmatprep.subr.mxu0 0.0
    %141 = vmatpush1.msra.mxu0 0.0
    %142 = vmatprep.subr.mxu0 0.0
    %143 = vmatpush1.msra.mxu0 0.0
    %144 = vmatprep.subr.mxu0 0.0
    %145 = vmatpush1.msra.mxu0 0.0
    %146 = vmatprep.subr.mxu0 0.0
    %147 = vmatpush1.msra.mxu0 0.0
    %148 = vmatprep.subr.mxu0 0.0
    %149 = vmatpush1.msra.mxu0 0.0
    %150 = vmatprep.mubr.f32.mxu0 0.0
    %151 = vmatmul.mubr.f32.gmra.mrb[0].mxu0 %v84
    %v152 = vpop.f32.mrb[0].mxu0
    %v153 = vadd.f32 %v81, %v152
    %v154 = vpop.f32.mrb[0].mxu0
    %155 = vdwg.mxu0
    %v156 = vmax.f32 %v153, 0.0
    %v158 = vlaneseq
    %v159 = vshrl.u32 %v158, 7
    %v160 = vsub.s32 0, %v159
    %v161 = vrot.slane %v76, %v160
    %v162 = vlaneseq
    %v163 = vshrl.u32 %v162, 7
    %v164 = vsub.s32 1, %v163
    %v165 = vrot.slane %v76, %v164
    %vm168 = vcmask 654336
    %v170 = vsel %vm168, %v156, 0
    %172 = vmatprep.subr.mxu0 %v25
    %173 = vmatpush1.msra.mxu0 %v24
    %174 = vmatprep.subr.mxu0 %v27
    %175 = vmatpush1.msra.mxu0 %v26
    %176 = vmatprep.subr.mxu0 %v29
    %177 = vmatpush1.msra.mxu0 %v28
    %178 = vmatprep.subr.mxu0 %v31
    %179 = vmatpush1.msra.mxu0 %v30
    %180 = vmatprep.subr.mxu0 %v33
    %181 = vmatpush1.msra.mxu0 %v32
    %182 = vmatprep.subr.mxu0 %v35
    %183 = vmatpush1.msra.mxu0 %v34
    %184 = vmatprep.subr.mxu0 %v37
    %185 = vmatpush1.msra.mxu0 %v36
    %186 = vmatprep.subr.mxu0 %v39
    %187 = vmatpush1.msra.mxu0 %v38
    %188 = vmatprep.subr.mxu0 %v41
    %189 = vmatpush1.msra.mxu0 %v40
    %190 = vmatprep.subr.mxu0 %v43
    %191 = vmatpush1.msra.mxu0 %v42
    %192 = vmatprep.subr.mxu0 0.0
    %193 = vmatpush1.msra.mxu0 0.0
    %194 = vmatprep.subr.mxu0 0.0
    %195 = vmatpush1.msra.mxu0 0.0
    %196 = vmatprep.subr.mxu0 0.0
    %197 = vmatpush1.msra.mxu0 0.0
    %198 = vmatprep.subr.mxu0 0.0
    %199 = vmatpush1.msra.mxu0 0.0
    %200 = vmatprep.subr.mxu0 0.0
    %201 = vmatpush1.msra.mxu0 0.0
    %202 = vmatprep.subr.mxu0 0.0
    %203 = vmatpush1.msra.mxu0 0.0
    %204 = vmatprep.subr.mxu0 0.0
    %205 = vmatpush1.msra.mxu0 0.0
    %206 = vmatprep.subr.mxu0 0.0
    %207 = vmatpush1.msra.mxu0 0.0
    %208 = vmatprep.subr.mxu0 0.0
    %209 = vmatpush1.msra.mxu0 0.0
    %210 = vmatprep.subr.mxu0 0.0
    %211 = vmatpush1.msra.mxu0 0.0
    %212 = vmatprep.subr.mxu0 0.0
    %213 = vmatpush1.msra.mxu0 0.0
    %214 = vmatprep.subr.mxu0 0.0
    %215 = vmatpush1.msra.mxu0 0.0
    %216 = vmatprep.subr.mxu0 0.0
    %217 = vmatpush1.msra.mxu0 0.0
    %218 = vmatprep.subr.mxu0 0.0
    %219 = vmatpush1.msra.mxu0 0.0
    %220 = vmatprep.subr.mxu0 0.0
    %221 = vmatpush1.msra.mxu0 0.0
    %222 = vmatprep.subr.mxu0 0.0
    %223 = vmatpush1.msra.mxu0 0.0
    %224 = vmatprep.subr.mxu0 0.0
    %225 = vmatpush1.msra.mxu0 0.0
    %226 = vmatprep.subr.mxu0 0.0
    %227 = vmatpush1.msra.mxu0 0.0
    %228 = vmatprep.subr.mxu0 0.0
    %229 = vmatpush1.msra.mxu0 0.0
    %230 = vmatprep.subr.mxu0 0.0
    %231 = vmatpush1.msra.mxu0 0.0
    %232 = vmatprep.subr.mxu0 0.0
    %233 = vmatpush1.msra.mxu0 0.0
    %234 = vmatprep.subr.mxu0 0.0
    %235 = vmatpush1.msra.mxu0 0.0
    %236 = vmatprep.mubr.f32.mxu0 0.0
    %237 = vmatmul.mubr.f32.gmra.mrb[0].mxu0 %v170
    %v238 = vpop.f32.mrb[0].mxu0
    %v239 = vadd.f32 %v161, %v238
    %v240 = vpop.f32.mrb[0].mxu0
    %v241 = vadd.f32 %v165, %v240
    %242 = vdwg.mxu0
    %244 = vrot.lane.b32.xlu0 %v239, 40
    %v245 = vpop.permute.xlu0 %244
    %247 = vrot.lane.b32.xlu0 %v239, 80
    %v248 = vpop.permute.xlu0 %247
    %250 = vrot.lane.b32.xlu0 %v239, 120
    %v251 = vpop.permute.xlu0 %250
    %253 = vrot.lane.b32.xlu0 %v239, 32
    %v254 = vpop.permute.xlu0 %253
    %vm256 = vcmask 326656
    %v257 = vsel %vm256, %v239, %v245
    %v258 = vsel %vm168, %v257, %v248
    %vm259 = vcmask 982016
    %v260 = vsel %vm259, %v258, %v251
    %vm261 = vcmask 261120
    %v262 = vsel %vm261, %v251, %v254
    %264 = vrot.lane.b32.xlu0 %v239, 88
    %v265 = vpop.permute.xlu0 %264
    %266 = vrot.lane.b32.xlu0 %v241, 88
    %v267 = vpop.permute.xlu0 %266
    %vm268 = vcmask 719872
    %v269 = vsel %vm268, %v265, %v267
    %v272 = vmul.f32 %v260, %v269
    %v273 = vmul.f32 %v262, %v267
    %276 = vrot.lane.b32.xlu0 %v272, 40
    %v277 = vpop.permute.xlu0 %276
    %278 = vrot.lane.b32.xlu0 %v273, 40
    %v279 = vpop.permute.xlu0 %278
    %v280 = vsel %vm256, %v277, %v279
    %v282 = vsel %vm256, %v239, %v277
    %v283 = vlaneseq
    %v284 = vshrl.u32 %v283, 7
    %v285 = vsub.s32 0, %v284
    %v286 = vrot.slane %v77, %v285
    %vm287 = vcmask 916480
    %v288 = vsel %vm287, %v280, 0
    %290 = vmatprep.subr.mxu0 0.0
    %291 = vmatpush1.msra.mxu0 %v44
    %292 = vmatprep.subr.mxu0 0.0
    %293 = vmatpush1.msra.mxu0 %v45
    %294 = vmatprep.subr.mxu0 0.0
    %295 = vmatpush1.msra.mxu0 %v46
    %296 = vmatprep.subr.mxu0 0.0
    %297 = vmatpush1.msra.mxu0 %v47
    %298 = vmatprep.subr.mxu0 0.0
    %299 = vmatpush1.msra.mxu0 %v48
    %300 = vmatprep.subr.mxu0 0.0
    %301 = vmatpush1.msra.mxu0 %v49
    %302 = vmatprep.subr.mxu0 0.0
    %303 = vmatpush1.msra.mxu0 %v50
    %304 = vmatprep.subr.mxu0 0.0
    %305 = vmatpush1.msra.mxu0 %v51
    %306 = vmatprep.subr.mxu0 0.0
    %307 = vmatpush1.msra.mxu0 %v52
    %308 = vmatprep.subr.mxu0 0.0
    %309 = vmatpush1.msra.mxu0 %v53
    %310 = vmatprep.subr.mxu0 0.0
    %311 = vmatpush1.msra.mxu0 %v54
    %312 = vmatprep.subr.mxu0 0.0
    %313 = vmatpush1.msra.mxu0 %v55
    %314 = vmatprep.subr.mxu0 0.0
    %315 = vmatpush1.msra.mxu0 %v56
    %316 = vmatprep.subr.mxu0 0.0
    %317 = vmatpush1.msra.mxu0 %v57
    %318 = vmatprep.subr.mxu0 0.0
    %319 = vmatpush1.msra.mxu0 %v58
    %320 = vmatprep.subr.mxu0 0.0
    %321 = vmatpush1.msra.mxu0 %v59
    %322 = vmatprep.subr.mxu0 0.0
    %323 = vmatpush1.msra.mxu0 %v60
    %324 = vmatprep.subr.mxu0 0.0
    %325 = vmatpush1.msra.mxu0 %v61
    %326 = vmatprep.subr.mxu0 0.0
    %327 = vmatpush1.msra.mxu0 %v62
    %328 = vmatprep.subr.mxu0 0.0
    %329 = vmatpush1.msra.mxu0 %v63
    %330 = vmatprep.subr.mxu0 0.0
    %331 = vmatpush1.msra.mxu0 %v64
    %332 = vmatprep.subr.mxu0 0.0
    %333 = vmatpush1.msra.mxu0 %v65
    %334 = vmatprep.subr.mxu0 0.0
    %335 = vmatpush1.msra.mxu0 %v66
    %336 = vmatprep.subr.mxu0 0.0
    %337 = vmatpush1.msra.mxu0 %v67
    %338 = vmatprep.subr.mxu0 0.0
    %339 = vmatpush1.msra.mxu0 %v68
    %340 = vmatprep.subr.mxu0 0.0
    %341 = vmatpush1.msra.mxu0 %v69
    %342 = vmatprep.subr.mxu0 0.0
    %343 = vmatpush1.msra.mxu0 %v70
    %344 = vmatprep.subr.mxu0 0.0
    %345 = vmatpush1.msra.mxu0 %v71
    %346 = vmatprep.subr.mxu0 0.0
    %347 = vmatpush1.msra.mxu0 %v72
    %348 = vmatprep.subr.mxu0 0.0
    %349 = vmatpush1.msra.mxu0 %v73
    %350 = vmatprep.subr.mxu0 0.0
    %351 = vmatpush1.msra.mxu0 0.0
    %352 = vmatprep.subr.mxu0 0.0
    %353 = vmatpush1.msra.mxu0 0.0
    %354 = vmatprep.mubr.f32.mxu0 %v288
    %355 = vmatmul.mubr.f32.gmra.mrb[0].mxu0 %v282
    %v356 = vpop.f32.mrb[0].mxu0
    %v357 = vadd.f32 %v286, %v356
    %v358 = vpop.f32.mrb[0].mxu0
    %359 = vdwg.mxu0
    %360 = vst [vmem:[#allocation2] sm:$0xff] %v357
    // Predicated region
    $region14: #{tpu_custom_call.1} parent=1 // pred_check
      _
    $region15: #{tpu_custom_call.1} parent=1 // pred_check_branch
      %362 = sbr.rel (0) target = $region17
    $region16: #{tpu_custom_call.1} parent=1 // pred_region
      %s364 = ssub.s32 128, 128
      %365 = vsyncadd [#allocation3], %s364
      %s367 = sshll.u32 [#allocation2], 4
      %s368 = int_to_ptr.vmem [resolvable:$true] %s367
      %370 = dma.vmem_to_hbm [thread:$0]  %s368, 128, %s3, [#allocation3]
    $region17: #{tpu_custom_call.1} parent=1 // pred_fallthru
      _
    // Predicated region
    $region18: #{tpu_custom_call.1} parent=1 // pred_check
      _
    $region19: #{tpu_custom_call.1} parent=1 // pred_check_branch
      %372 = sbr.rel (0) target = $region21
    $region20: #{tpu_custom_call.1} parent=1 // pred_region
      %373 = dma.done [#allocation3], 128
    $region21: #{tpu_custom_call.1} parent=1 // pred_fallthru
      _
    %374 = vsyncpa [#allocation3], 1

</llo_original>
